<compile_context>
chip_gen: v7x
topology: tpu7x:2x2x1
jax: 0.10.0
libtpu: 0.0.40
codegen_flags: <defaults>
</compile_context>

<pallas_src>
import math
import numpy as np

import jax
import jax.numpy as jnp
from jax.experimental import pallas as pl
from jax.experimental.pallas import tpu as pltpu


def _round_up(x, m):
    return ((x + m - 1) // m) * m


# ----------------------------------------------------------------------------
# Generic tiled linear (x @ W^T + b) kernel
# ----------------------------------------------------------------------------
def _linear_kernel(x_ref, w_ref, b_ref, o_ref):
    o_ref[...] = (
        jnp.dot(x_ref[...], w_ref[...], preferred_element_type=jnp.float32)
        + b_ref[...]
    )


def pallas_linear(x2d, w, b, tm=256):
    """x2d: (M, K) f32, w: (N, K) torch-style weight, b: (N,).  Returns (M, N) f32.

    M is zero-padded up to a tile multiple (tile capped at round_up(M, 8)), so any M works.
    tm=256 targets the v6e/v7x MXU; use tm=128 on v5e.
    """
    x2d = jnp.asarray(x2d, jnp.float32)
    M, K = x2d.shape
    N = w.shape[0]
    tm_eff = min(tm, _round_up(M, 8))
    M_pad = _round_up(M, tm_eff)
    if M_pad != M:
        x2d = jnp.pad(x2d, ((0, M_pad - M), (0, 0)))
    wt = jnp.asarray(w, jnp.float32).T            # (K, N)
    b2 = jnp.asarray(b, jnp.float32).reshape(1, N)

    vmem = int((tm_eff * K + K * N + N + tm_eff * N) * 4 * 2 * 1.5)
    vmem = min(max(vmem, 32 * 1024 * 1024), 64 * 1024 * 1024)

    out = pl.pallas_call(
        _linear_kernel,
        out_shape=jax.ShapeDtypeStruct((M_pad, N), jnp.float32),
        grid=(M_pad // tm_eff,),
        in_specs=[
            pl.BlockSpec((tm_eff, K), lambda i: (i, 0)),
            pl.BlockSpec((K, N), lambda i: (0, 0)),
            pl.BlockSpec((1, N), lambda i: (0, 0)),
        ],
        out_specs=pl.BlockSpec((tm_eff, N), lambda i: (i, 0)),
        compiler_params=pltpu.CompilerParams(
            dimension_semantics=("parallel",), vmem_limit_bytes=vmem),
    )(x2d, wt, b2)
    return out[:M] if M_pad != M else out


# ----------------------------------------------------------------------------
# Instance (box) attention sampling + aggregation + fused out_proj kernel
# ----------------------------------------------------------------------------
def make_instance_attn_kernel(level_shapes, tl1, num_head, num_level, kernel_size,
                              head_dim, hw_chunk):
    P = kernel_size * kernel_size
    d_model = num_head * head_dim
    nhl = num_head * num_level
    ks2 = kernel_size // 2
    if kernel_size % 2 == 0:
        k0 = -kernel_size // 2 + 0.5
    else:
        k0 = float(-(kernel_size - 1) // 2)
    inv_ks = 1.0 / kernel_size

    # Static K-banding of every level's flattened H*W axis so the (tl1*P, chunk) tent
    # matrix stays small no matter how large the feature map is.
    # TODO(synk): gate chunks that cannot overlap the tile's boxes with pl.when (scalar
    # bbox bounds) and/or switch this static loop to lax.fori_loop for very large maps.
    chunk_bounds = []
    for (H, W) in level_shapes:
        HW = H * W
        chunk_bounds.append([(c0, min(c0 + hw_chunk, HW))
                             for c0 in range(0, HW, hw_chunk)])

    # expanded kernel position p = r*ks + c reads compact (2x2) cell
    # q(p) = (r // (ks/2)) * 2 + (c // (ks/2))   (== the two repeat_interleave calls)
    cmap = [((p // kernel_size) // ks2) * 2 + ((p % kernel_size) // ks2)
            for p in range(P)]

    def kernel(refw_ref, offb_ref, logits_ref, *rest):
        value_refs = rest[:num_level]
        wo_ref = rest[num_level]                      # (d_model, d_model) = W_out^T
        bo_ref = rest[num_level + 1]                  # (1, d_model)
        out_ref, mask_ref, spat_ref, lvl_ref = rest[num_level + 2: num_level + 6]
        rows_ref = rest[num_level + 6]                # VMEM scratch (tl1*(1+P), d_model)

        refw = refw_ref[0]                                      # (tl1, 4) cx,cy,w,h
        offb = offb_ref[0].reshape(tl1, num_head, num_level, 4)

        # ---- softmaxes on the COMPACT (2x2) logits, one shared exp() ----
        # spatial softmax over the expanded (nl*ks*ks) axis == compact softmax whose
        # denominator is scaled by the multiplicity (ks/2)^2 of each compact logit.
        lg = logits_ref[0].reshape(tl1, num_head, num_level * 4)
        m = jnp.max(lg, axis=-1, keepdims=True)
        e = jnp.exp(lg - m)
        denom_sp = jnp.sum(e, axis=-1, keepdims=True) * float(ks2 * ks2)
        e4 = e.reshape(tl1, num_head, num_level, 4)
        spat_c = e4 / denom_sp[..., None]                        # (tl1, nh, nl, 4)
        lvl_c = e4 / jnp.sum(e4, axis=2, keepdims=True)          # level softmax

        # exact 2x2 -> ks x ks expansion (static column gather via concat), lane-dense
        spat_e = jnp.concatenate([spat_c[..., q:q + 1] for q in cmap], axis=-1)
        lvl_e = jnp.concatenate([lvl_c[..., q:q + 1] for q in cmap], axis=-1)
        spat_e = spat_e.reshape(tl1, nhl * P)                    # (tl1, nh*nl*P)
        lvl_e = lvl_e.reshape(tl1, nhl * P)
        spat_ref[0] = spat_e
        lvl_ref[0] = lvl_e

        # ---- _where_to_attend: boxes = ref + off/8 * ref[w,h,w,h]; grid = c + k*relu(size)
        rw = refw[:, 2][:, None, None]                           # (tl1, 1, 1)
        rh = refw[:, 3][:, None, None]
        cx = refw[:, 0][:, None, None] + offb[..., 0] / 8.0 * rw     # (tl1, nh, nl)
        cy = refw[:, 1][:, None, None] + offb[..., 1] / 8.0 * rh
        sx = jnp.maximum(rw + offb[..., 2] / 8.0 * rw, 0.0)
        sy = jnp.maximum(rh + offb[..., 3] / 8.0 * rh, 0.0)

        # kernel-window offsets (x = column, y = row of the ks x ks window), baked consts
        p_iota = jax.lax.broadcasted_iota(jnp.int32, (1, P), 1)
        kx = ((p_iota % kernel_size).astype(jnp.float32) + k0) * inv_ks   # (1, P)
        ky = ((p_iota // kernel_size).astype(jnp.float32) + k0) * inv_ks

        # per-(level, chunk) pixel coordinates, hoisted OUT of the head loop
        pix = {}
        for lev, (H, W) in enumerate(level_shapes):
            for (c0, c1) in chunk_bounds[lev]:
                lin = jax.lax.broadcasted_iota(jnp.int32, (1, c1 - c0), 1) + c0
                pix[(lev, c0)] = ((lin % W).astype(jnp.float32),
                                  (lin // W).astype(jnp.float32))

        hd = head_dim
        for h in range(num_head):
            out_h = jnp.zeros((tl1, hd), jnp.float32)
            mask_h = jnp.zeros((tl1, P, hd), jnp.float32)
            for lev, (H, W) in enumerate(level_shapes):
                # sampling locations in pixel coords (grid_sample, align_corners=False)
                gx = (cx[:, h, lev][:, None] + kx * sx[:, h, lev][:, None]) * W - 0.5
                gy = (cy[:, h, lev][:, None] + ky * sy[:, h, lev][:, None]) * H - 0.5

                samp = jnp.zeros((tl1, P, hd), jnp.float32)
                for (c0, c1) in chunk_bounds[lev]:
                    pxf, pyf = pix[(lev, c0)]
                    # 4-nonzero bilinear "tent" weights, only for this K band
                    A = (jnp.maximum(1.0 - jnp.abs(gx[..., None] - pxf), 0.0)
                         * jnp.maximum(1.0 - jnp.abs(gy[..., None] - pyf), 0.0))
                    v_c = value_refs[lev][0, c0:c1, h * hd:(h + 1) * hd]      # bf16
                    samp = samp + jnp.dot(
                        A.reshape(tl1 * P, c1 - c0).astype(jnp.bfloat16), v_c,
                        preferred_element_type=jnp.float32).reshape(tl1, P, hd)

                base = (h * num_level + lev) * P
                w_sp = spat_e[:, base:base + P]
                w_lv = lvl_e[:, base:base + P]
                out_h = out_h + jnp.sum(w_sp[:, :, None] * samp, axis=1)
                mask_h = mask_h + w_lv[:, :, None] * samp

            # write per-head slices straight into the fused-projection row buffer
            col = h * hd
            rows_ref[0:tl1, col:col + hd] = out_h
            rows_ref[tl1:tl1 * (1 + P), col:col + hd] = mask_h.reshape(tl1 * P, hd)

        # ---- fused out_proj over the concatenated (output | mask_output) rows ----
        proj = (jnp.dot(rows_ref[...], wo_ref[...], preferred_element_type=jnp.float32)
                + bo_ref[...])
        out_ref[0] = proj[0:tl1, :]
        mask_ref[0] = proj[tl1:, :].reshape(tl1, P, d_model)

    return kernel


# ----------------------------------------------------------------------------
# Module glue (parameter setup, reshapes) + forward
# ----------------------------------------------------------------------------
def init_params(key, d_model, num_head, num_level):
    n_out = num_head * num_level * 4
    ks = jax.random.split(key, 6)

    def xavier(k, shape):
        a = math.sqrt(6.0 / (shape[0] + shape[1]))
        return jax.random.uniform(k, shape, jnp.float32, -a, a)

    # Note: torch's _reset_parameters zero-inits the box/attn weights; small random values
    # are used instead so the synthetic run exercises non-trivial offsets / attention.
    return dict(
        value_proj_w=xavier(ks[0], (d_model, d_model)),
        value_proj_b=jnp.zeros((d_model,), jnp.float32),
        out_proj_w=xavier(ks[1], (d_model, d_model)),
        out_proj_b=jnp.zeros((d_model,), jnp.float32),
        box_w=0.02 * jax.random.normal(ks[2], (n_out, d_model), jnp.float32),
        box_b=jax.random.uniform(ks[3], (n_out,), jnp.float32),
        attn_w=0.02 * jax.random.normal(ks[4], (n_out, d_model), jnp.float32),
        attn_b=0.02 * jax.random.normal(ks[5], (n_out,), jnp.float32),
    )


def instance_attention_forward(params, query, value, v_shape, v_mask, v_start_index,
                               v_valid_ratios, ref_windows, *, num_head, num_level,
                               kernel_size, l1_tile=64, hw_chunk=512):
    b, l1, d_model = query.shape
    l2 = value.shape[1]
    head_dim = d_model // num_head
    P = kernel_size * kernel_size
    n_out = num_head * num_level * 4
    nhlP = num_head * num_level * P
    # The torch module's repeat_interleave of a (...,2,2) logit block only reproduces a
    # (ks, ks) window for even kernel sizes; make that explicit.
    assert kernel_size % 2 == 0, "InstanceAttention assumes an even kernel_size"

    # value projection (Pallas matmul) + masking; keep lane-dense (l2, d_model) layout and
    # store in bf16 so the VMEM-resident level maps are half size.
    value_p = pallas_linear(value.reshape(b * l2, d_model),
                            params["value_proj_w"], params["value_proj_b"])
    value_p = value_p.reshape(b, l2, d_model)
    if v_mask is not None:
        value_p = jnp.where(v_mask[..., None], 0.0, value_p)
    value_p = value_p.astype(jnp.bfloat16)

    # fused attn-logit + box-offset projection: one pass over the query activations
    qb_w = jnp.concatenate([jnp.asarray(params["attn_w"], jnp.float32),
                            jnp.asarray(params["box_w"], jnp.float32)], axis=0)
    qb_b = jnp.concatenate([jnp.asarray(params["attn_b"], jnp.float32),
                            jnp.asarray(params["box_b"], jnp.float32)], axis=0)
    qb = pallas_linear(query.reshape(b * l1, d_model), qb_w, qb_b)
    logits_c = qb[:, :n_out].reshape(b, l1, n_out)       # compact (2x2) logits
    offb = qb[:, n_out:].reshape(b, l1, n_out)           # box offsets

    # TODO(synk): v_valid_ratios scaling of the sampling grid is not wired (None path only).
    assert v_valid_ratios is None

    # l1 tiling (padded); value-level blocks are independent of the l1-tile index, so the
    # level feature maps stay VMEM-resident while the query-side tiles stream.
    tl1 = min(_round_up(l1, 8), _round_up(l1_tile, 8))
    l1_pad = _round_up(l1, tl1)
    ref_w_in = jnp.asarray(ref_windows, jnp.float32)
    if l1_pad != l1:
        pad = ((0, 0), (0, l1_pad - l1), (0, 0))
        ref_w_in = jnp.pad(ref_w_in, pad)
        offb = jnp.pad(offb, pad)
        logits_c = jnp.pad(logits_c, pad)
    n_tiles = l1_pad // tl1

    max_hw = max(H * W for H, W in v_shape)
    hw_chunk = _round_up(max(8, min(hw_chunk, max_hw)), 8)
    sum_hw = sum(H * W for H, W in v_shape)

    value_levels = [value_p[:, s:s + H * W, :]
                    for (H, W), s in zip(v_shape, v_start_index)]
    wo_t = jnp.asarray(params["out_proj_w"], jnp.float32).T          # (d_model, d_model)
    bo = jnp.asarray(params["out_proj_b"], jnp.float32).reshape(1, d_model)

    kernel = make_instance_attn_kernel(tuple(v_shape), tl1, num_head, num_level,
                                       kernel_size, head_dim, hw_chunk)
    # TODO(synk): for very large multi-scale maps on v7x (64 MiB VMEM), add a head grid
    # axis so only one head's value columns are resident per sweep.

    def _call(single_buffer_values):
        def vspec(HW):
            if single_buffer_values:
                # level maps change only with the batch index -> single-buffer them
                return pl.BlockSpec((1, HW, d_model), lambda bi, li: (bi, 0, 0),
                                    pipeline_mode=pl.Buffered(1))
            return pl.BlockSpec((1, HW, d_model), lambda bi, li: (bi, 0, 0))

        nbuf = 1 if single_buffer_values else 2
        vmem = int(1.5 * (
            sum_hw * d_model * 2 * nbuf                          # resident bf16 level maps
            + (tl1 * (4 + 2 * n_out)) * 4 * 2                    # refw/offb/logits (x2 buf)
            + (d_model * d_model + d_model) * 4 * 2              # out_proj weight/bias
            + (tl1 * d_model * (1 + P) + 2 * tl1 * nhlP) * 4 * 2  # outputs (x2 buf)
            + tl1 * (1 + P) * d_model * 4                        # rows scratch
            + tl1 * P * hw_chunk * 4 * 3))                       # in-kernel tent temporaries
        vmem = min(max(vmem, 32 * 1024 * 1024), 64 * 1024 * 1024)

        in_specs = [
            pl.BlockSpec((1, tl1, 4), lambda bi, li: (bi, li, 0)),
            pl.BlockSpec((1, tl1, n_out), lambda bi, li: (bi, li, 0)),
            pl.BlockSpec((1, tl1, n_out), lambda bi, li: (bi, li, 0)),
        ] + [vspec(H * W) for (H, W) in v_shape] + [
            pl.BlockSpec((d_model, d_model), lambda bi, li: (0, 0)),
            pl.BlockSpec((1, d_model), lambda bi, li: (0, 0)),
        ]
        out_specs = (
            pl.BlockSpec((1, tl1, d_model), lambda bi, li: (bi, li, 0)),
            pl.BlockSpec((1, tl1, P, d_model), lambda bi, li: (bi, li, 0, 0)),
            pl.BlockSpec((1, tl1, nhlP), lambda bi, li: (bi, li, 0)),
            pl.BlockSpec((1, tl1, nhlP), lambda bi, li: (bi, li, 0)),
        )
        out_shapes = (
            jax.ShapeDtypeStruct((b, l1_pad, d_model), jnp.float32),
            jax.ShapeDtypeStruct((b, l1_pad, P, d_model), jnp.float32),
            jax.ShapeDtypeStruct((b, l1_pad, nhlP), jnp.float32),
            jax.ShapeDtypeStruct((b, l1_pad, nhlP), jnp.float32),
        )
        return pl.pallas_call(
            kernel,
            out_shape=out_shapes,
            grid=(b, n_tiles),
            in_specs=in_specs,
            out_specs=out_specs,
            scratch_shapes=[pltpu.VMEM((tl1 * (1 + P), d_model), jnp.float32)],
            compiler_params=pltpu.CompilerParams(
                dimension_semantics=("parallel", "parallel"),
                vmem_limit_bytes=vmem),
        )(ref_w_in, offb, logits_c, *value_levels, wo_t, bo)

    try:
        out, mask_out, spat, lvl = _call(single_buffer_values=True)
    except Exception:
        # TODO(synk): pl.Buffered(1) single-buffering unavailable on this jax version;
        # fall back to default double buffering of the resident level maps.
        out, mask_out, spat, lvl = _call(single_buffer_values=False)

    output = out[:, :l1]
    mask_output = mask_out[:, :l1]
    spatial_attn = spat[:, :l1].reshape(b, l1, num_head, num_level,
                                        kernel_size, kernel_size)
    level_attn = lvl[:, :l1].reshape(b, l1, num_head, num_level,
                                     kernel_size, kernel_size)
    return output, mask_output, (spatial_attn, level_attn)


# ----------------------------------------------------------------------------
# Pure-JAX reference (mirrors the torch module, f32, explicit 4-corner bilinear)
# ----------------------------------------------------------------------------
def _reference_forward(params, query, value, v_shape, v_mask, v_start_index,
                       ref_windows, *, num_head, num_level, kernel_size):
    b, l1, d_model = query.shape
    l2 = value.shape[1]
    hd = d_model // num_head
    ks = kernel_size
    P = ks * ks

    def linear(x, w, bias):
        return jnp.matmul(x, jnp.asarray(w, jnp.float32).T,
                          precision=jax.lax.Precision.HIGHEST) + bias

    v = linear(value, params["value_proj_w"], params["value_proj_b"])
    v = jnp.where(v_mask[..., None], 0.0, v)
    # mirror the kernel's bf16 storage of the projected value (the only dtype difference)
    v = v.astype(jnp.bfloat16).astype(jnp.float32)
    v = v.reshape(b, l2, num_head, hd)

    attn = linear(query, params["attn_w"], params["attn_b"])
    attn = attn.reshape(b, l1, num_head, num_level, 2, 2)
    attn = jnp.repeat(jnp.repeat(attn, ks // 2, axis=-1), ks // 2, axis=-2)
    spat = jax.nn.softmax(attn.reshape(b, l1, num_head, -1), axis=-1)
    spat = spat.reshape(b, l1, num_head, num_level, ks, ks)
    lvl = jax.nn.softmax(attn, axis=3)

    offb = linear(query, params["box_w"], params["box_b"])
    offb = offb.reshape(b, l1, num_head, num_level, 4)
    refw = ref_windows[:, :, None, None, :]
    boxes = refw + offb / 8.0 * refw[..., jnp.array([2, 3, 2, 3])]
    center, size = boxes[..., :2], boxes[..., 2:]
    idx = jnp.arange(ks, dtype=jnp.float32) - ks / 2 + 0.5      # even ks
    ki, kj = jnp.meshgrid(idx, idx, indexing="ij")
    kernel_indices = jnp.stack([kj, ki], axis=-1).reshape(-1, 2) / ks   # (P, 2)
    grid = center[..., None, :] + kernel_indices * jax.nn.relu(size)[..., None, :]

    out = jnp.zeros((b, l1, num_head, hd), jnp.float32)
    mask_out = jnp.zeros((b, l1, num_head, P, hd), jnp.float32)
    bidx = jnp.arange(b)[:, None, None, None]
    hidx = jnp.arange(num_head)[None, None, :, None]
    for lev, (H, W) in enumerate(v_shape):
        s0 = v_start_index[lev]
        vl = v[:, s0:s0 + H * W].reshape(b, H, W, num_head, hd)
        gx = grid[:, :, :, lev, :, 0] * W - 0.5
        gy = grid[:, :, :, lev, :, 1] * H - 0.5
        x0, y0 = jnp.floor(gx), jnp.floor(gy)
        samp = jnp.zeros((b, l1, num_head, P, hd), jnp.float32)
        for dy in (0, 1):
            for dx in (0, 1):
                xi, yi = x0 + dx, y0 + dy
                wgt = (jnp.maximum(1.0 - jnp.abs(gx - xi), 0.0)
                       * jnp.maximum(1.0 - jnp.abs(gy - yi), 0.0))
                inb = (xi >= 0) & (xi < W) & (yi >= 0) & (yi < H)
                xc = jnp.clip(xi, 0, W - 1).astype(jnp.int32)
                yc = jnp.clip(yi, 0, H - 1).astype(jnp.int32)
                gathered = vl[bidx, yc, xc, hidx, :]
                samp = samp + jnp.where(inb[..., None], wgt[..., None] * gathered, 0.0)
        sp = spat[:, :, :, lev].reshape(b, l1, num_head, P)
        lv = lvl[:, :, :, lev].reshape(b, l1, num_head, P)
        out = out + jnp.sum(sp[..., None] * samp, axis=3)
        mask_out = mask_out + lv[..., None] * samp

    out = out.reshape(b, l1, d_model)
    mask_out = mask_out.transpose(0, 1, 3, 2, 4).reshape(b, l1, P, d_model)
    out = linear(out, params["out_proj_w"], params["out_proj_b"])
    mask_out = linear(mask_out, params["out_proj_w"], params["out_proj_b"])
    return out, mask_out, spat, lvl


# ----------------------------------------------------------------------------
if __name__ == "__main__":
    d_model, num_head, num_level, kernel_size = 32, 4, 2, 4
    b, l1 = 2, 16
    v_shape = [(8, 8), (4, 4)]
    sizes = [h * w for h, w in v_shape]
    v_start_index = [0] + list(np.cumsum(sizes))[:-1]
    l2 = sum(sizes)
    P = kernel_size * kernel_size

    key = jax.random.PRNGKey(0)
    kp, kq, kv, km, kr = jax.random.split(key, 5)
    params = init_params(kp, d_model, num_head, num_level)

    query = jax.random.normal(kq, (b, l1, d_model), jnp.float32)
    value = jax.random.normal(kv, (b, l2, d_model), jnp.float32)
    v_mask = jax.random.uniform(km, (b, l2)) < 0.1            # a few padded positions
    kc, ksz = jax.random.split(kr)
    centers = jax.random.uniform(kc, (b, l1, 2), jnp.float32, 0.2, 0.8)
    whs = jax.random.uniform(ksz, (b, l1, 2), jnp.float32, 0.1, 0.4)
    ref_windows = jnp.concatenate([centers, whs], axis=-1)    # (b, l1, 4) normalized

    output, mask_output, (spat_w, lvl_w) = instance_attention_forward(
        params, query, value, v_shape, v_mask, v_start_index, None, ref_windows,
        num_head=num_head, num_level=num_level, kernel_size=kernel_size,
        l1_tile=8, hw_chunk=32)   # 2 l1 tiles/batch + chunked HW band on level 0

    jax.block_until_ready((output, mask_output, spat_w, lvl_w))

    assert output.shape == (b, l1, d_model)
    assert mask_output.shape == (b, l1, P, d_model)
    assert spat_w.shape == (b, l1, num_head, num_level, kernel_size, kernel_size)
    assert lvl_w.shape == (b, l1, num_head, num_level, kernel_size, kernel_size)
    assert bool(jnp.all(jnp.isfinite(output))) and bool(jnp.all(jnp.isfinite(mask_output)))

    # pure-JAX reference check (bf16 value storage mirrored; matmul inputs otherwise f32)
    ref_out, ref_mask, ref_spat, ref_lvl = _reference_forward(
        params, query, value, v_shape, v_mask, v_start_index, ref_windows,
        num_head=num_head, num_level=num_level, kernel_size=kernel_size)
    assert float(jnp.max(jnp.abs(spat_w - ref_spat))) < 5e-3
    assert float(jnp.max(jnp.abs(lvl_w - ref_lvl))) < 5e-3
    assert float(jnp.max(jnp.abs(output - ref_out))) < 1e-1
    assert float(jnp.max(jnp.abs(mask_output - ref_mask))) < 1e-1

    print("KERNEL_OK")
</pallas_src>

<mosaic_0001>
module attributes {stable_mosaic.version = 11 : i64} {
  func.func @_linear_kernel(%arg0: i32, %arg1: memref<160x32xf32, #tpu.memory_space<vmem>>, %arg2: memref<32x32xf32, #tpu.memory_space<vmem>>, %arg3: memref<1x32xf32, #tpu.memory_space<vmem>>, %arg4: memref<160x32xf32, #tpu.memory_space<vmem>>) attributes {dimension_semantics = [#tpu.dimension_semantics<parallel>], iteration_bounds = array<i64: 1>, scalar_prefetch = 0 : i64, scratch_operands = 0 : i64, tpu.core_type = #tpu.core_type<tc>, window_params = [{transform_indices = @transform_0, window_bounds = array<i64: 160, 32>}, {pipeline_mode = #tpu.pipeline_mode<synchronous>, transform_indices = @transform_1, window_bounds = array<i64: 32, 32>}, {pipeline_mode = #tpu.pipeline_mode<synchronous>, transform_indices = @transform_2, window_bounds = array<i64: 1, 32>}, {transform_indices = @transform_3, window_bounds = array<i64: 160, 32>}]} {
    %c0 = arith.constant 0 : index
    %c0_0 = arith.constant 0 : index
    %0 = vector.load %arg1[%c0, %c0_0] : memref<160x32xf32, #tpu.memory_space<vmem>>, vector<160x32xf32>
    %c0_1 = arith.constant 0 : index
    %c0_2 = arith.constant 0 : index
    %1 = vector.load %arg2[%c0_1, %c0_2] : memref<32x32xf32, #tpu.memory_space<vmem>>, vector<32x32xf32>
    %cst = arith.constant dense<0.000000e+00> : vector<160x32xf32>
    %2 = tpu.matmul %0, %1, %cst {dimension_numbers = #tpu.dot_dimension_numbers<[1], [0], [0], [1], [0, 0, 1, 1], [], []>} : vector<160x32xf32>, vector<32x32xf32>, vector<160x32xf32> -> vector<160x32xf32>
    %c0_3 = arith.constant 0 : index
    %c0_4 = arith.constant 0 : index
    %3 = vector.load %arg3[%c0_3, %c0_4] : memref<1x32xf32, #tpu.memory_space<vmem>>, vector<1x32xf32>
    %4 = vector.broadcast %3 : vector<1x32xf32> to vector<160x32xf32>
    %5 = arith.addf %2, %4 : vector<160x32xf32>
    %c0_5 = arith.constant 0 : index
    %c0_6 = arith.constant 0 : index
    %6 = vector.load %arg4[%c0_5, %c0_6] : memref<160x32xf32, #tpu.memory_space<vmem>>, vector<160x32xf32>
    tpu.vector_store %arg4[%c0_5, %c0_6], %5 {strides = array<i32>} : memref<160x32xf32, #tpu.memory_space<vmem>>, vector<160x32xf32>,
    return
  }
  func.func @transform_0(%arg0: i32) -> (i32, i32) {
    %c0_i32 = arith.constant 0 : i32
    %c0_i32_0 = arith.constant 0 : i32
    return %arg0, %c0_i32 : i32, i32
  }
  func.func @transform_1(%arg0: i32) -> (i32, i32) {
    %c0_i32 = arith.constant 0 : i32
    %c0_i32_0 = arith.constant 0 : i32
    %c0_i32_1 = arith.constant 0 : i32
    return %c0_i32, %c0_i32_0 : i32, i32
  }
  func.func @transform_2(%arg0: i32) -> (i32, i32) {
    %c0_i32 = arith.constant 0 : i32
    %c0_i32_0 = arith.constant 0 : i32
    %c0_i32_1 = arith.constant 0 : i32
    return %c0_i32, %c0_i32_0 : i32, i32
  }
  func.func @transform_3(%arg0: i32) -> (i32, i32) {
    %c0_i32 = arith.constant 0 : i32
    %c0_i32_0 = arith.constant 0 : i32
    return %arg0, %c0_i32 : i32, i32
  }
}

</mosaic_0001>

<llo_original>
// kernel: tpu_custom_call.1
$region0: #{tpu_custom_call.1}
  #allocation0 [shape = 'u32[]', space=smem, size = 0x4, offset = 0x4, fixed_abs, tag = 'smem constant byte address 0x4 - core index']
  #allocation1 [shape = 'u32[144,128]{1,0:T(1,128)}', space=vmem, size = 0x12000, scoped, tag = 'internal scratch']
  %s0 = inlined_call_operand.vmem [shape: f32[160,32], index: 0, kind: input, shape index: {}]
  %s1 = inlined_call_operand.vmem [shape: f32[32,32], index: 1, kind: input, shape index: {}]
  %s2 = inlined_call_operand.vmem [shape: f32[1,32], index: 2, kind: input, shape index: {}]
  %s3 = inlined_call_operand.vmem [shape: f32[160,32], index: 3, kind: output, shape index: {}]
  %s4 = sld [smem:[#allocation0]]
  $region22: #{tpu_custom_call.1} parent=0
    _
  %s6 = ssub.s32 1, %s4
  %s7 = scalar_select 0, %s6, %s4
  // Predicated region
  $region2: #{tpu_custom_call.1} parent=0 // pred_check
    _
  $region3: #{tpu_custom_call.1} parent=0 // pred_check_branch
    %9 = sbr.rel (0) target = $region5
  $region4: #{tpu_custom_call.1} parent=0 // pred_region
    _
  $region5: #{tpu_custom_call.1} parent=0 // pred_fallthru
    _
  // Predicated region
  $region6: #{tpu_custom_call.1} parent=0 // pred_check
    _
  $region7: #{tpu_custom_call.1} parent=0 // pred_check_branch
    %11 = sbr.rel (0) target = $region9
  $region8: #{tpu_custom_call.1} parent=0 // pred_region
    _
  $region9: #{tpu_custom_call.1} parent=0 // pred_fallthru
    _
  // Predicated region
  $region10: #{tpu_custom_call.1} parent=0 // pred_check
    _
  $region11: #{tpu_custom_call.1} parent=0 // pred_check_branch
    %13 = sbr.rel (0) target = $region13
  $region12: #{tpu_custom_call.1} parent=0 // pred_region
    _
  $region13: #{tpu_custom_call.1} parent=0 // pred_fallthru
    _
  %v14 = vld [vmem:[%s0] sm:$0xff]
  %v15 = vld [vmem:[%s0 + $0x8] sm:$0xff]
  %v16 = vld [vmem:[%s0 + $0x10] sm:$0xff]
  %v17 = vld [vmem:[%s0 + $0x18] sm:$0xff]
  %v18 = vld [vmem:[%s0 + $0x20] sm:$0xff]
  %v19 = vld [vmem:[%s0 + $0x28] sm:$0xff]
  %v20 = vld [vmem:[%s0 + $0x30] sm:$0xff]
  %v21 = vld [vmem:[%s0 + $0x38] sm:$0xff]
  %v22 = vld [vmem:[%s0 + $0x40] sm:$0xff]
  %v23 = vld [vmem:[%s0 + $0x48] sm:$0xff]
  %v24 = vld [vmem:[%s0 + $0x50] sm:$0xff]
  %v25 = vld [vmem:[%s0 + $0x58] sm:$0xff]
  %v26 = vld [vmem:[%s0 + $0x60] sm:$0xff]
  %v27 = vld [vmem:[%s0 + $0x68] sm:$0xff]
  %v28 = vld [vmem:[%s0 + $0x70] sm:$0xff]
  %v29 = vld [vmem:[%s0 + $0x78] sm:$0xff]
  %v30 = vld [vmem:[%s0 + $0x80] sm:$0xff]
  %v31 = vld [vmem:[%s0 + $0x88] sm:$0xff]
  %v32 = vld [vmem:[%s0 + $0x90] sm:$0xff]
  %v33 = vld [vmem:[%s0 + $0x98] sm:$0xff]
  %v34 = vld [vmem:[%s1] sm:$0xff]
  %v35 = vld [vmem:[%s1 + $0x8] sm:$0xff]
  %v36 = vld [vmem:[%s1 + $0x10] sm:$0xff]
  %v37 = vld [vmem:[%s1 + $0x18] sm:$0xff]
  %v38 = vld [vmem:[%s2] sm:$0x1]
  %v40 = vlaneseq
  %v41 = vshrl.u32 %v40, 7
  %v42 = vsub.s32 0, %v41
  %v43 = vrot.slane %v38, %v42
  %vm45 = vcmask 261120
  %v47 = vsel %vm45, %v14, 0
  %v50 = vsel %vm45, %v15, 0
  %v53 = vsel %vm45, %v16, 0
  %v56 = vsel %vm45, %v17, 0
  %v59 = vsel %vm45, %v18, 0
  %v62 = vsel %vm45, %v19, 0
  %v65 = vsel %vm45, %v20, 0
  %v68 = vsel %vm45, %v21, 0
  %v71 = vsel %vm45, %v22, 0
  %v74 = vsel %vm45, %v23, 0
  %v77 = vsel %vm45, %v24, 0
  %v80 = vsel %vm45, %v25, 0
  %v83 = vsel %vm45, %v26, 0
  %v86 = vsel %vm45, %v27, 0
  %v89 = vsel %vm45, %v28, 0
  %v92 = vsel %vm45, %v29, 0
  %v95 = vsel %vm45, %v30, 0
  %v98 = vsel %vm45, %v31, 0
  %v101 = vsel %vm45, %v32, 0
  %v104 = vsel %vm45, %v33, 0
  %106 = vmatprep.subr.mxu0 0.0
  %107 = vmatpush1.msra.mxu0 %v34
  %108 = vmatprep.subr.mxu0 0.0
  %109 = vmatpush1.msra.mxu0 %v35
  %110 = vmatprep.subr.mxu0 0.0
  %111 = vmatpush1.msra.mxu0 %v36
  %112 = vmatprep.subr.mxu0 0.0
  %113 = vmatpush1.msra.mxu0 %v37
  %114 = vmatprep.subr.mxu0 0.0
  %115 = vmatpush1.msra.mxu0 0.0
  %116 = vmatprep.subr.mxu0 0.0
  %117 = vmatpush1.msra.mxu0 0.0
  %118 = vmatprep.subr.mxu0 0.0
  %119 = vmatpush1.msra.mxu0 0.0
  %120 = vmatprep.subr.mxu0 0.0
  %121 = vmatpush1.msra.mxu0 0.0
  %122 = vmatprep.subr.mxu0 0.0
  %123 = vmatpush1.msra.mxu0 0.0
  %124 = vmatprep.subr.mxu0 0.0
  %125 = vmatpush1.msra.mxu0 0.0
  %126 = vmatprep.subr.mxu0 0.0
  %127 = vmatpush1.msra.mxu0 0.0
  %128 = vmatprep.subr.mxu0 0.0
  %129 = vmatpush1.msra.mxu0 0.0
  %130 = vmatprep.subr.mxu0 0.0
  %131 = vmatpush1.msra.mxu0 0.0
  %132 = vmatprep.subr.mxu0 0.0
  %133 = vmatpush1.msra.mxu0 0.0
  %134 = vmatprep.subr.mxu0 0.0
  %135 = vmatpush1.msra.mxu0 0.0
  %136 = vmatprep.subr.mxu0 0.0
  %137 = vmatpush1.msra.mxu0 0.0
  %138 = vmatprep.subr.mxu0 0.0
  %139 = vmatpush1.msra.mxu0 0.0
  %140 = vmatprep.subr.mxu0 0.0
  %141 = vmatpush1.msra.mxu0 0.0
  %142 = vmatprep.subr.mxu0 0.0
  %143 = vmatpush1.msra.mxu0 0.0
  %144 = vmatprep.subr.mxu0 0.0
  %145 = vmatpush1.msra.mxu0 0.0
  %146 = vmatprep.subr.mxu0 0.0
  %147 = vmatpush1.msra.mxu0 0.0
  %148 = vmatprep.subr.mxu0 0.0
  %149 = vmatpush1.msra.mxu0 0.0
  %150 = vmatprep.subr.mxu0 0.0
  %151 = vmatpush1.msra.mxu0 0.0
  %152 = vmatprep.subr.mxu0 0.0
  %153 = vmatpush1.msra.mxu0 0.0
  %154 = vmatprep.subr.mxu0 0.0
  %155 = vmatpush1.msra.mxu0 0.0
  %156 = vmatprep.subr.mxu0 0.0
  %157 = vmatpush1.msra.mxu0 0.0
  %158 = vmatprep.subr.mxu0 0.0
  %159 = vmatpush1.msra.mxu0 0.0
  %160 = vmatprep.subr.mxu0 0.0
  %161 = vmatpush1.msra.mxu0 0.0
  %162 = vmatprep.subr.mxu0 0.0
  %163 = vmatpush1.msra.mxu0 0.0
  %164 = vmatprep.subr.mxu0 0.0
  %165 = vmatpush1.msra.mxu0 0.0
  %166 = vmatprep.subr.mxu0 0.0
  %167 = vmatpush1.msra.mxu0 0.0
  %168 = vmatprep.subr.mxu0 0.0
  %169 = vmatpush1.msra.mxu0 0.0
  %170 = vmatprep.mubr.f32.mxu0 0.0
  %171 = vmatmul.mubr.f32.gmra.mrb[0].mxu0 %v47
  %v172 = vpop.f32.mrb[0].mxu0
  %v173 = vadd.f32 %v43, %v172
  %v174 = vpop.f32.mrb[0].mxu0
  %175 = vmatprep.mubr.f32.mxu0 0.0
  %176 = vmatmul.mubr.f32.gmra.mrb[0].mxu0 %v50
  %v177 = vpop.f32.mrb[0].mxu0
  %v178 = vadd.f32 %v43, %v177
  %v179 = vpop.f32.mrb[0].mxu0
  %180 = vmatprep.mubr.f32.mxu0 0.0
  %181 = vmatmul.mubr.f32.gmra.mrb[0].mxu0 %v53
  %v182 = vpop.f32.mrb[0].mxu0
  %v183 = vadd.f32 %v43, %v182
  %v184 = vpop.f32.mrb[0].mxu0
  %185 = vmatprep.mubr.f32.mxu0 0.0
  %186 = vmatmul.mubr.f32.gmra.mrb[0].mxu0 %v56
  %v187 = vpop.f32.mrb[0].mxu0
  %v188 = vadd.f32 %v43, %v187
  %v189 = vpop.f32.mrb[0].mxu0
  %190 = vmatprep.mubr.f32.mxu0 0.0
  %191 = vmatmul.mubr.f32.gmra.mrb[0].mxu0 %v59
  %v192 = vpop.f32.mrb[0].mxu0
  %v193 = vadd.f32 %v43, %v192
  %v194 = vpop.f32.mrb[0].mxu0
  %195 = vmatprep.mubr.f32.mxu0 0.0
  %196 = vmatmul.mubr.f32.gmra.mrb[0].mxu0 %v62
  %v197 = vpop.f32.mrb[0].mxu0
  %v198 = vadd.f32 %v43, %v197
  %v199 = vpop.f32.mrb[0].mxu0
  %200 = vmatprep.mubr.f32.mxu0 0.0
  %201 = vmatmul.mubr.f32.gmra.mrb[0].mxu0 %v65
  %v202 = vpop.f32.mrb[0].mxu0
  %v203 = vadd.f32 %v43, %v202
  %v204 = vpop.f32.mrb[0].mxu0
  %205 = vmatprep.mubr.f32.mxu0 0.0
  %206 = vmatmul.mubr.f32.gmra.mrb[0].mxu0 %v68
  %v207 = vpop.f32.mrb[0].mxu0
  %v208 = vadd.f32 %v43, %v207
  %v209 = vpop.f32.mrb[0].mxu0
  %210 = vmatprep.mubr.f32.mxu0 0.0
  %211 = vmatmul.mubr.f32.gmra.mrb[0].mxu0 %v71
  %v212 = vpop.f32.mrb[0].mxu0
  %v213 = vadd.f32 %v43, %v212
  %v214 = vpop.f32.mrb[0].mxu0
  %215 = vmatprep.mubr.f32.mxu0 0.0
  %216 = vmatmul.mubr.f32.gmra.mrb[0].mxu0 %v74
  %v217 = vpop.f32.mrb[0].mxu0
  %v218 = vadd.f32 %v43, %v217
  %v219 = vpop.f32.mrb[0].mxu0
  %220 = vmatprep.mubr.f32.mxu0 0.0
  %221 = vmatmul.mubr.f32.gmra.mrb[0].mxu0 %v77
  %v222 = vpop.f32.mrb[0].mxu0
  %v223 = vadd.f32 %v43, %v222
  %v224 = vpop.f32.mrb[0].mxu0
  %225 = vmatprep.mubr.f32.mxu0 0.0
  %226 = vmatmul.mubr.f32.gmra.mrb[0].mxu0 %v80
  %v227 = vpop.f32.mrb[0].mxu0
  %v228 = vadd.f32 %v43, %v227
  %v229 = vpop.f32.mrb[0].mxu0
  %230 = vmatprep.mubr.f32.mxu0 0.0
  %231 = vmatmul.mubr.f32.gmra.mrb[0].mxu0 %v83
  %v232 = vpop.f32.mrb[0].mxu0
  %v233 = vadd.f32 %v43, %v232
  %v234 = vpop.f32.mrb[0].mxu0
  %235 = vmatprep.mubr.f32.mxu0 0.0
  %236 = vmatmul.mubr.f32.gmra.mrb[0].mxu0 %v86
  %v237 = vpop.f32.mrb[0].mxu0
  %v238 = vadd.f32 %v43, %v237
  %v239 = vpop.f32.mrb[0].mxu0
  %240 = vmatprep.mubr.f32.mxu0 0.0
  %241 = vmatmul.mubr.f32.gmra.mrb[0].mxu0 %v89
  %v242 = vpop.f32.mrb[0].mxu0
  %v243 = vadd.f32 %v43, %v242
  %v244 = vpop.f32.mrb[0].mxu0
  %245 = vmatprep.mubr.f32.mxu0 0.0
  %246 = vmatmul.mubr.f32.gmra.mrb[0].mxu0 %v92
  %v247 = vpop.f32.mrb[0].mxu0
  %v248 = vadd.f32 %v43, %v247
  %v249 = vpop.f32.mrb[0].mxu0
  %250 = vmatprep.mubr.f32.mxu0 0.0
  %251 = vmatmul.mubr.f32.gmra.mrb[0].mxu0 %v95
  %v252 = vpop.f32.mrb[0].mxu0
  %v253 = vadd.f32 %v43, %v252
  %v254 = vpop.f32.mrb[0].mxu0
  %255 = vmatprep.mubr.f32.mxu0 0.0
  %256 = vmatmul.mubr.f32.gmra.mrb[0].mxu0 %v98
  %v257 = vpop.f32.mrb[0].mxu0
  %v258 = vadd.f32 %v43, %v257
  %v259 = vpop.f32.mrb[0].mxu0
  %260 = vmatprep.mubr.f32.mxu0 0.0
  %261 = vmatmul.mubr.f32.gmra.mrb[0].mxu0 %v101
  %v262 = vpop.f32.mrb[0].mxu0
  %v263 = vadd.f32 %v43, %v262
  %v264 = vpop.f32.mrb[0].mxu0
  %265 = vmatprep.mubr.f32.mxu0 0.0
  %266 = vmatmul.mubr.f32.gmra.mrb[0].mxu0 %v104
  %v267 = vpop.f32.mrb[0].mxu0
  %v268 = vadd.f32 %v43, %v267
  %v269 = vpop.f32.mrb[0].mxu0
  %270 = vdwg.mxu0
  %271 = vst.msk [vmem:[%s3] sm:$0xff] %vm45, %v173
  %272 = vst.msk [vmem:[%s3 + $0x8] sm:$0xff] %vm45, %v178
  %273 = vst.msk [vmem:[%s3 + $0x10] sm:$0xff] %vm45, %v183
  %274 = vst.msk [vmem:[%s3 + $0x18] sm:$0xff] %vm45, %v188
  %275 = vst.msk [vmem:[%s3 + $0x20] sm:$0xff] %vm45, %v193
  %276 = vst.msk [vmem:[%s3 + $0x28] sm:$0xff] %vm45, %v198
  %277 = vst.msk [vmem:[%s3 + $0x30] sm:$0xff] %vm45, %v203
  %278 = vst.msk [vmem:[%s3 + $0x38] sm:$0xff] %vm45, %v208
  %279 = vst.msk [vmem:[%s3 + $0x40] sm:$0xff] %vm45, %v213
  %280 = vst.msk [vmem:[%s3 + $0x48] sm:$0xff] %vm45, %v218
  %281 = vst.msk [vmem:[%s3 + $0x50] sm:$0xff] %vm45, %v223
  %282 = vst.msk [vmem:[%s3 + $0x58] sm:$0xff] %vm45, %v228
  %283 = vst.msk [vmem:[%s3 + $0x60] sm:$0xff] %vm45, %v233
  %284 = vst.msk [vmem:[%s3 + $0x68] sm:$0xff] %vm45, %v238
  %285 = vst.msk [vmem:[%s3 + $0x70] sm:$0xff] %vm45, %v243
  %286 = vst.msk [vmem:[%s3 + $0x78] sm:$0xff] %vm45, %v248
  %287 = vst.msk [vmem:[%s3 + $0x80] sm:$0xff] %vm45, %v253
  %288 = vst.msk [vmem:[%s3 + $0x88] sm:$0xff] %vm45, %v258
  %289 = vst.msk [vmem:[%s3 + $0x90] sm:$0xff] %vm45, %v263
  %290 = vst.msk [vmem:[%s3 + $0x98] sm:$0xff] %vm45, %v268
  // Predicated region
  $region14: #{tpu_custom_call.1} parent=0 // pred_check
    _
  $region15: #{tpu_custom_call.1} parent=0 // pred_check_branch
    %292 = sbr.rel (0) target = $region17
  $region16: #{tpu_custom_call.1} parent=0 // pred_region
    _
  $region17: #{tpu_custom_call.1} parent=0 // pred_fallthru
    _
  // Predicated region
  $region18: #{tpu_custom_call.1} parent=0 // pred_check
    _
  $region19: #{tpu_custom_call.1} parent=0 // pred_check_branch
    %294 = sbr.rel (0) target = $region21
  $region20: #{tpu_custom_call.1} parent=0 // pred_region
    _
  $region21: #{tpu_custom_call.1} parent=0 // pred_fallthru
    _

</llo_original>
